<compile_context>
chip_gen: v7x
topology: tpu7x:2x2x1
jax: 0.10.0
libtpu: 0.0.40
codegen_flags: <defaults>
</compile_context>

<pallas_src>
import jax
import jax.numpy as jnp
import numpy as np
from jax.experimental import pallas as pl
from jax.experimental.pallas import tpu as pltpu

LOGSTD_MIN = -20.0
LOGSTD_MAX = 2.0

_LANE = 128
_KNEE_BYTES = 2 << 20      # ~2 MiB input block: past the measured HBM roofline knee
_MAX_ROWS = 2048           # row cap at the knee for typical (small) action dims
_MIN_STEPS = 4             # >= 2 grid steps per v7x TensorCore


def _round_up(x, m):
    return ((x + m - 1) // m) * m


def _round_down(x, m):
    return (x // m) * m


def _vmem_capacity_bytes():
    try:
        return int(pltpu.get_tpu_info().vmem_capacity_bytes)
    except Exception:
        return 64 * 1024 * 1024  # truly conservative: smallest per-TC VMEM (v7x)


def _lane_chunk(a, itemsize, sub):
    """Largest 128-multiple divisor of `a` whose minimum-height block stays near the knee."""
    if a * sub * itemsize <= _KNEE_BYTES:
        return a
    m = a // _LANE
    best = 1
    d = 1
    while d * d <= m:
        if m % d == 0:
            for cand in (d, m // d):
                if cand * _LANE * sub * itemsize <= _KNEE_BYTES and cand > best:
                    best = cand
        d += 1
    return best * _LANE


def _compute_dtype(dt):
    # bf16 math is native on v6e/v7x (halves vreg pressure); everything else -> f32
    # (v5e VPU/EUP have no bf16 fast path anyway, and logstd is clamped so exp is safe).
    return dt if dt == jnp.bfloat16 else jnp.float32


def _kernel_halves(mu_in_ref, ls_in_ref, mu_ref, std_ref, best_ref):
    """Aligned path: mu and logstd arrive as separate half-width blocks."""
    cdt = _compute_dtype(mu_in_ref.dtype)
    mu = mu_in_ref[...]
    logstd = jnp.clip(ls_in_ref[...].astype(cdt), LOGSTD_MIN, LOGSTD_MAX)
    mu_ref[...] = mu                                       # verbatim pass-through
    std_ref[...] = jnp.exp(logstd).astype(std_ref.dtype)
    best_ref[...] = jnp.tanh(mu.astype(cdt)).astype(best_ref.dtype)


def _kernel_packed(x_ref, mu_ref, std_ref, best_ref):
    """Unaligned path: one full-width block, split inside the kernel (A is small)."""
    a = mu_ref.shape[-1]
    cdt = _compute_dtype(x_ref.dtype)
    x = x_ref[...]
    mu = x[:, :a]
    logstd = jnp.clip(x[:, a:].astype(cdt), LOGSTD_MIN, LOGSTD_MAX)
    mu_ref[...] = mu
    std_ref[...] = jnp.exp(logstd).astype(std_ref.dtype)
    best_ref[...] = jnp.tanh(mu.astype(cdt)).astype(best_ref.dtype)


def tanh_gaussian_dist_forward(x):
    """Returns (mean, stddev, best_action) of the TanhGaussianPolicy."""
    b, two_a = x.shape
    assert two_a % 2 == 0, "feature dim must hold (mu, logstd) pairs"
    a = two_a // 2
    dtype = x.dtype
    itemsize = jnp.dtype(dtype).itemsize
    sub = 16 if itemsize == 2 else 8
    aligned = (a % _LANE == 0)

    # ---- lane chunk (aligned path only; guards the very-wide-A case) ----
    if aligned:
        ak = _lane_chunk(a, itemsize, sub)
    else:
        ak = a  # full-width blocks; fine for typical (small) RL action dims
        # TODO(synk): an unaligned *and* very wide A would need masked lane chunking.

    # ---- batch tile near the HBM roofline knee (~0.5-4 MiB input blocks) ----
    bm = _KNEE_BYTES // max(ak * itemsize, 1)
    bm = max(sub, min(_round_down(bm, sub), _MAX_ROWS))
    if b <= bm:
        bm = b                                   # full batch dim => exempt from 8-row rule
    elif pl.cdiv(b, bm) < _MIN_STEPS and b >= _MIN_STEPS * sub:
        bm = max(sub, _round_up(pl.cdiv(b, _MIN_STEPS), sub))
    nb = pl.cdiv(b, bm)                          # ragged last block: reads padded, writes masked
    na = (a // ak) if aligned else 1

    # ---- VMEM: double-buffered block set + compute-dtype temporaries, big headroom ----
    vmem_cap = _vmem_capacity_bytes()
    blocks = 10 * bm * ak * itemsize             # (2A in + 3A out) x 2 buffers per row-tile
    temps = 3 * bm * ak * 4                      # in-kernel compute temporaries (worst case f32)
    vmem_limit = int(min(max(blocks + temps + (2 << 20), 16 << 20),
                         max(32 << 20, vmem_cap // 2)))

    out_shapes = tuple(jax.ShapeDtypeStruct((b, a), dtype) for _ in range(3))
    cost = pl.CostEstimate(
        flops=2 * b * a,                         # clip/select, tiny
        transcendentals=2 * b * a,               # exp + tanh per element
        bytes_accessed=5 * b * a * itemsize,     # read 2A, write 3A per row
    )
    params = pltpu.CompilerParams(
        dimension_semantics=("parallel", "parallel") if aligned else ("parallel",),
        vmem_limit_bytes=vmem_limit,
    )

    if aligned:
        def _mu_map(i, j):
            return (i, j)

        def _ls_map(i, j):
            return (i, na + j)                   # logstd half starts at block index na

        out_spec = pl.BlockSpec((bm, ak), _mu_map)
        mean, std, best = pl.pallas_call(
            _kernel_halves,
            out_shape=out_shapes,
            grid_spec=pltpu.PrefetchScalarGridSpec(
                num_scalar_prefetch=0,
                grid=(nb, na),
                in_specs=[pl.BlockSpec((bm, ak), _mu_map),
                          pl.BlockSpec((bm, ak), _ls_map)],
                out_specs=[out_spec, out_spec, out_spec],
            ),
            compiler_params=params,
            cost_estimate=cost,
        )(x, x)   # same HBM array, two half-width streams; each half read exactly once
    else:
        out_spec = pl.BlockSpec((bm, a), lambda i: (i, 0))
        mean, std, best = pl.pallas_call(
            _kernel_packed,
            out_shape=out_shapes,
            grid_spec=pltpu.PrefetchScalarGridSpec(
                num_scalar_prefetch=0,
                grid=(nb,),
                in_specs=[pl.BlockSpec((bm, 2 * a), lambda i: (i, 0))],
                out_specs=[out_spec, out_spec, out_spec],
            ),
            compiler_params=params,
            cost_estimate=cost,
        )(x)

    return mean, std, best


def _reference(x):
    a = x.shape[1] // 2
    mu = x[:, :a]
    logstd = jnp.clip(x[:, a:], LOGSTD_MIN, LOGSTD_MAX)
    return mu, jnp.exp(logstd), jnp.tanh(mu)


def _check(x):
    mu, std, best = tanh_gaussian_dist_forward(x)
    jax.block_until_ready((mu, std, best))
    mu_r, std_r, best_r = _reference(x)
    np.testing.assert_allclose(np.asarray(mu), np.asarray(mu_r), rtol=1e-6, atol=1e-6)
    np.testing.assert_allclose(np.asarray(std), np.asarray(std_r), rtol=1e-5, atol=1e-6)
    np.testing.assert_allclose(np.asarray(best), np.asarray(best_r), rtol=1e-6, atol=1e-6)


if __name__ == "__main__":
    key = jax.random.PRNGKey(0)
    k0, k1, k2, k3 = jax.random.split(key, 4)

    # Aligned path, single grid step: batch=8, action_dim=128 -> x is [8, 256].
    x0 = 8.0 * jax.random.normal(k0, (8, 2 * 128), dtype=jnp.float32)
    _check(x0)

    # Unaligned path (in-kernel split, no padding): batch=24, action_dim=40.
    x1 = 8.0 * jax.random.normal(k1, (24, 2 * 40), dtype=jnp.float32)
    _check(x1)

    # Aligned path, multi-step grid (>=4 steps / megacore sharding): batch=4096.
    x2 = 8.0 * jax.random.normal(k2, (4096, 2 * 128), dtype=jnp.float32)
    _check(x2)

    # Unaligned path with ragged last batch block (masked boundary writes).
    x3 = 8.0 * jax.random.normal(k3, (5000, 2 * 40), dtype=jnp.float32)
    _check(x3)

    print("KERNEL_OK")
</pallas_src>

<mosaic_0001>
module attributes {stable_mosaic.version = 11 : i64} {
  func.func @_kernel_halves(%arg0: i32, %arg1: i32, %arg2: memref<8x128xf32, #tpu.memory_space<vmem>>, %arg3: memref<8x128xf32, #tpu.memory_space<vmem>>, %arg4: memref<8x128xf32, #tpu.memory_space<vmem>>, %arg5: memref<8x128xf32, #tpu.memory_space<vmem>>, %arg6: memref<8x128xf32, #tpu.memory_space<vmem>>) attributes {dimension_semantics = [#tpu.dimension_semantics<parallel>, #tpu.dimension_semantics<parallel>], iteration_bounds = array<i64: 1, 1>, scalar_prefetch = 0 : i64, scratch_operands = 0 : i64, tpu.core_type = #tpu.core_type<tc>, window_params = [{transform_indices = @transform_0, window_bounds = array<i64: 8, 128>}, {transform_indices = @transform_1, window_bounds = array<i64: 8, 128>}, {transform_indices = @transform_2, window_bounds = array<i64: 8, 128>}, {transform_indices = @transform_3, window_bounds = array<i64: 8, 128>}, {transform_indices = @transform_4, window_bounds = array<i64: 8, 128>}]} {
    %c0 = arith.constant 0 : index
    %c0_0 = arith.constant 0 : index
    %0 = vector.load %arg2[%c0, %c0_0] : memref<8x128xf32, #tpu.memory_space<vmem>>, vector<8x128xf32>
    %c0_1 = arith.constant 0 : index
    %c0_2 = arith.constant 0 : index
    %1 = vector.load %arg3[%c0_1, %c0_2] : memref<8x128xf32, #tpu.memory_space<vmem>>, vector<8x128xf32>
    %cst = arith.constant -2.000000e+01 : f32
    %cst_3 = arith.constant 2.000000e+00 : f32
    %2 = vector.broadcast %cst : f32 to vector<8x128xf32>
    %3 = arith.maximumf %2, %1 : vector<8x128xf32>
    %4 = vector.broadcast %cst_3 : f32 to vector<8x128xf32>
    %5 = arith.minimumf %4, %3 : vector<8x128xf32>
    %c0_4 = arith.constant 0 : index
    %c0_5 = arith.constant 0 : index
    %6 = vector.load %arg4[%c0_4, %c0_5] : memref<8x128xf32, #tpu.memory_space<vmem>>, vector<8x128xf32>
    tpu.vector_store %arg4[%c0_4, %c0_5], %0 {strides = array<i32>} : memref<8x128xf32, #tpu.memory_space<vmem>>, vector<8x128xf32>,
    %7 = math.exp %5 : vector<8x128xf32>
    %c0_6 = arith.constant 0 : index
    %c0_7 = arith.constant 0 : index
    %8 = vector.load %arg5[%c0_6, %c0_7] : memref<8x128xf32, #tpu.memory_space<vmem>>, vector<8x128xf32>
    tpu.vector_store %arg5[%c0_6, %c0_7], %7 {strides = array<i32>} : memref<8x128xf32, #tpu.memory_space<vmem>>, vector<8x128xf32>,
    %9 = math.tanh %0 : vector<8x128xf32>
    %c0_8 = arith.constant 0 : index
    %c0_9 = arith.constant 0 : index
    %10 = vector.load %arg6[%c0_8, %c0_9] : memref<8x128xf32, #tpu.memory_space<vmem>>, vector<8x128xf32>
    tpu.vector_store %arg6[%c0_8, %c0_9], %9 {strides = array<i32>} : memref<8x128xf32, #tpu.memory_space<vmem>>, vector<8x128xf32>,
    return
  }
  func.func @transform_0(%arg0: i32, %arg1: i32) -> (i32, i32) {
    %c0_i32 = arith.constant 0 : i32
    return %arg0, %arg1 : i32, i32
  }
  func.func @transform_1(%arg0: i32, %arg1: i32) -> (i32, i32) {
    %c1_i32 = arith.constant 1 : i32
    %0 = arith.addi %c1_i32, %arg1 : i32
    %c0_i32 = arith.constant 0 : i32
    return %arg0, %0 : i32, i32
  }
  func.func @transform_2(%arg0: i32, %arg1: i32) -> (i32, i32) {
    %c0_i32 = arith.constant 0 : i32
    return %arg0, %arg1 : i32, i32
  }
  func.func @transform_3(%arg0: i32, %arg1: i32) -> (i32, i32) {
    %c0_i32 = arith.constant 0 : i32
    return %arg0, %arg1 : i32, i32
  }
  func.func @transform_4(%arg0: i32, %arg1: i32) -> (i32, i32) {
    %c0_i32 = arith.constant 0 : i32
    return %arg0, %arg1 : i32, i32
  }
}

</mosaic_0001>

<llo_original>
// kernel: tpu_custom_call.1
$region0: #{tpu_custom_call.1}
  #allocation0 [shape = 'u32[]', space=smem, size = 0x4, offset = 0x4, fixed_abs, tag = 'smem constant byte address 0x4 - core index']
  #allocation1 [shape = 'u32[144,128]{1,0:T(1,128)}', space=vmem, size = 0x12000, scoped, tag = 'internal scratch']
  %s0 = inlined_call_operand.hbm [shape: f32[8,256], index: 0, kind: input, shape index: {}]
  %s1 = inlined_call_operand.hbm [shape: f32[8,256], index: 1, kind: input, shape index: {}]
  %s2 = inlined_call_operand.hbm [shape: f32[8,128], index: 2, kind: output, shape index: {0}]
  %s3 = inlined_call_operand.hbm [shape: f32[8,128], index: 3, kind: output, shape index: {1}]
  %s4 = inlined_call_operand.hbm [shape: f32[8,128], index: 4, kind: output, shape index: {2}]
  %5 = xla_tuple %s2, %s3, %s4
  %s6 = sld [smem:[#allocation0]]
  $region42: #{tpu_custom_call.1} parent=0
    _
  %s8 = ssub.s32 1, %s6
  %s9 = scalar_select 0, %s8, %s6
  $region1: #{tpu_custom_call.1} parent=0
    #allocation2 [shape = 'u8[4096]{0}', space=vmem, size = 0x1000, scoped, tag = 'input window, operand 0, single buffered']
    #allocation3 [shape = 's32[1]{0}', space=sflag, size = 0x4, scoped, tag = 'scoped memory for tpu_custom_call.1']
    #allocation4 [shape = 's32[1]{0}', space=sflag, size = 0x4, scoped, tag = 'scoped memory for tpu_custom_call.1']
    #allocation5 [shape = 'u8[4096]{0}', space=vmem, size = 0x1000, scoped, tag = 'input window, operand 1, single buffered']
    #allocation6 [shape = 's32[1]{0}', space=sflag, size = 0x4, scoped, tag = 'scoped memory for tpu_custom_call.1']
    #allocation7 [shape = 'u8[4096]{0}', space=vmem, size = 0x1000, scoped, tag = 'output window, operand 0, single buffered']
    #allocation8 [shape = 'u8[4096]{0}', space=vmem, size = 0x1000, scoped, tag = 'output window, operand 1, single buffered']
    #allocation9 [shape = 's32[1]{0}', space=sflag, size = 0x4, scoped, tag = 'scoped memory for tpu_custom_call.1']
    #allocation10 [shape = 'u8[4096]{0}', space=vmem, size = 0x1000, scoped, tag = 'output window, operand 2, single buffered']
    %10 = vsyncpa [#allocation3], 0
    %11 = vsyncpa [#allocation6], 0
    %12 = vsyncpa [#allocation4], 0
    %13 = vsyncpa [#allocation9], 0
    // Predicated region
    $region2: #{tpu_custom_call.1} parent=1 // pred_check
      _
    $region3: #{tpu_custom_call.1} parent=1 // pred_check_branch
      %15 = sbr.rel (0) target = $region5
    $region4: #{tpu_custom_call.1} parent=1 // pred_region
      %s17 = ssub.s32 128, 128
      %18 = vsyncadd [#allocation3], %s17
      %s20 = sshll.u32 [#allocation2], 4
      %s21 = int_to_ptr.vmem [resolvable:$true] %s20
      %23 = dma.hbm_to_vmem [thread:$0]  %s0, 128, %s21, [#allocation3]
    $region5: #{tpu_custom_call.1} parent=1 // pred_fallthru
      _
    // Predicated region
    $region6: #{tpu_custom_call.1} parent=1 // pred_check
      _
    $region7: #{tpu_custom_call.1} parent=1 // pred_check_branch
      %25 = sbr.rel (0) target = $region9
    $region8: #{tpu_custom_call.1} parent=1 // pred_region
      %s26 = sadd.s32 0, 1
      %s28 = ssub.s32 128, 128
      %29 = vsyncadd [#allocation6], %s28
      %s30 = smul.addr %s26, 128
      %s31 = scalar_lea.hbm %s1, %s30
      %s33 = sshll.u32 [#allocation5], 4
      %s34 = int_to_ptr.vmem [resolvable:$true] %s33
      %36 = dma.hbm_to_vmem [thread:$0]  %s31, 128, %s34, [#allocation6]
    $region9: #{tpu_custom_call.1} parent=1 // pred_fallthru
      _
    // Predicated region
    $region10: #{tpu_custom_call.1} parent=1 // pred_check
      _
    $region11: #{tpu_custom_call.1} parent=1 // pred_check_branch
      %38 = sbr.rel (0) target = $region13
    $region12: #{tpu_custom_call.1} parent=1 // pred_region
      %39 = dma.done [#allocation3], 128
    $region13: #{tpu_custom_call.1} parent=1 // pred_fallthru
      _
    // Predicated region
    $region14: #{tpu_custom_call.1} parent=1 // pred_check
      _
    $region15: #{tpu_custom_call.1} parent=1 // pred_check_branch
      %41 = sbr.rel (0) target = $region17
    $region16: #{tpu_custom_call.1} parent=1 // pred_region
      %42 = dma.done [#allocation6], 128
    $region17: #{tpu_custom_call.1} parent=1 // pred_fallthru
      _
    %s43 = sadd.s32 0, 1
    %v44 = vld [vmem:[#allocation2] sm:$0xff]
    %v45 = vld [vmem:[#allocation5] sm:$0xff]
    %v46 = vmax.f32 %v45, -20.0
    %v47 = vmin.f32 %v46, 2.0
    %48 = vst [vmem:[#allocation7] sm:$0xff] %v44
    %v49 = vmul.f32 %v47, 1.442695
    %v50 = vpow.pop %v49
    %51 = vst [vmem:[#allocation8] sm:$0xff] %v50
    %v52 = vtanh.pop %v44
    %53 = vst [vmem:[#allocation10] sm:$0xff] %v52
    // Predicated region
    $region18: #{tpu_custom_call.1} parent=1 // pred_check
      _
    $region19: #{tpu_custom_call.1} parent=1 // pred_check_branch
      %55 = sbr.rel (0) target = $region21
    $region20: #{tpu_custom_call.1} parent=1 // pred_region
      %s57 = ssub.s32 128, 128
      %58 = vsyncadd [#allocation4], %s57
      %s60 = sshll.u32 [#allocation7], 4
      %s61 = int_to_ptr.vmem [resolvable:$true] %s60
      %63 = dma.vmem_to_hbm [thread:$0]  %s61, 128, %s2, [#allocation4]
    $region21: #{tpu_custom_call.1} parent=1 // pred_fallthru
      _
    // Predicated region
    $region22: #{tpu_custom_call.1} parent=1 // pred_check
      _
    $region23: #{tpu_custom_call.1} parent=1 // pred_check_branch
      %65 = sbr.rel (0) target = $region25
    $region24: #{tpu_custom_call.1} parent=1 // pred_region
      %s67 = ssub.s32 128, 128
      %68 = vsyncadd [#allocation9], %s67
      %s70 = sshll.u32 [#allocation8], 4
      %s71 = int_to_ptr.vmem [resolvable:$true] %s70
      %73 = dma.vmem_to_hbm [thread:$0]  %s71, 128, %s3, [#allocation9]
    $region25: #{tpu_custom_call.1} parent=1 // pred_fallthru
      _
    // Predicated region
    $region26: #{tpu_custom_call.1} parent=1 // pred_check
      _
    $region27: #{tpu_custom_call.1} parent=1 // pred_check_branch
      %75 = sbr.rel (0) target = $region29
    $region28: #{tpu_custom_call.1} parent=1 // pred_region
      %s77 = ssub.s32 128, 128
      %78 = vsyncadd [#allocation9], %s77
      %s80 = sshll.u32 [#allocation10], 4
      %s81 = int_to_ptr.vmem [resolvable:$true] %s80
      %83 = dma.vmem_to_hbm [thread:$0]  %s81, 128, %s4, [#allocation9]
    $region29: #{tpu_custom_call.1} parent=1 // pred_fallthru
      _
    // Predicated region
    $region30: #{tpu_custom_call.1} parent=1 // pred_check
      _
    $region31: #{tpu_custom_call.1} parent=1 // pred_check_branch
      %85 = sbr.rel (0) target = $region33
    $region32: #{tpu_custom_call.1} parent=1 // pred_region
      %86 = dma.done [#allocation4], 128
    $region33: #{tpu_custom_call.1} parent=1 // pred_fallthru
      _
    // Predicated region
    $region34: #{tpu_custom_call.1} parent=1 // pred_check
      _
    $region35: #{tpu_custom_call.1} parent=1 // pred_check_branch
      %88 = sbr.rel (0) target = $region37
    $region36: #{tpu_custom_call.1} parent=1 // pred_region
      %89 = dma.done [#allocation9], 128
    $region37: #{tpu_custom_call.1} parent=1 // pred_fallthru
      _
    // Predicated region
    $region38: #{tpu_custom_call.1} parent=1 // pred_check
      _
    $region39: #{tpu_custom_call.1} parent=1 // pred_check_branch
      %91 = sbr.rel (0) target = $region41
    $region40: #{tpu_custom_call.1} parent=1 // pred_region
      %92 = dma.done [#allocation9], 128
    $region41: #{tpu_custom_call.1} parent=1 // pred_fallthru
      _
    %93 = vsyncpa [#allocation3], 1
    %94 = vsyncpa [#allocation6], 1
    %95 = vsyncpa [#allocation4], 1
    %96 = vsyncpa [#allocation9], 1

</llo_original>
